<compile_context>
chip_gen: v5e
topology: v5e:2x2
jax: 0.10.0
libtpu: 0.0.40
codegen_flags: <defaults>
</compile_context>

<pallas_src>
import functools

import jax
import jax.numpy as jnp
from jax.experimental import pallas as pl
from jax.experimental.pallas import tpu as pltpu

LANE = 128                       # TPU lane width (last-dim vreg width)
COMPUTE_DTYPE = jnp.bfloat16     # MXU-native operand dtype; accumulation stays f32
OUT_STORE_DTYPE = jnp.bfloat16   # kernel writeback dtype (halves the output HBM stream)


def _round_up(x, m):
    return ((x + m - 1) // m) * m


def _encoder_kernel(x_ref,
                    w1_ref, b1_ref, w2_ref, b2_ref, w3_ref, b3_ref,
                    w4_ref, b4_ref, w5_ref, b5_ref,
                    o_ref):
    """One batch tile: 5 fused (matmul -> bias -> ReLU) layers, last layer linear."""
    # x arrives as f32 (no wrapper pad/cast pass); cast to bf16 on the VPU here.
    h = jnp.dot(x_ref[...].astype(COMPUTE_DTYPE), w1_ref[...],
                preferred_element_type=jnp.float32) + b1_ref[...]
    h = jnp.maximum(h, 0.0)
    h = jnp.dot(h.astype(COMPUTE_DTYPE), w2_ref[...],
                preferred_element_type=jnp.float32) + b2_ref[...]
    h = jnp.maximum(h, 0.0)
    h = jnp.dot(h.astype(COMPUTE_DTYPE), w3_ref[...],
                preferred_element_type=jnp.float32) + b3_ref[...]
    h = jnp.maximum(h, 0.0)
    h = jnp.dot(h.astype(COMPUTE_DTYPE), w4_ref[...],
                preferred_element_type=jnp.float32) + b4_ref[...]
    h = jnp.maximum(h, 0.0)
    # l5 (no activation); output is lane-padded to a 128 multiple -> unmasked bf16 stores.
    out = jnp.dot(h.astype(COMPUTE_DTYPE), w5_ref[...],
                  preferred_element_type=jnp.float32) + b5_ref[...]
    o_ref[...] = out.astype(o_ref.dtype)


def prepare_encoder_params(params):
    """One-time parameter prep, hoisted out of the per-call forward.

    * Weights -> bf16 (MXU operands); biases -> f32 (added post-accumulation).
    * W5/b5 last dim zero-padded to a 128-lane multiple (lane-dense output).
    Returns (prepared_params_tuple, n_z). Reuse `prepared` across forward calls.
    """
    w1, b1, w2, b2, w3, b3, w4, b4, w5, b5 = params
    n_z = w5.shape[-1]
    n_pad = _round_up(n_z, LANE)
    w5p = jnp.pad(w5, ((0, 0), (0, n_pad - n_z))).astype(COMPUTE_DTYPE)
    b5p = jnp.pad(b5, ((0, 0), (0, n_pad - n_z))).astype(jnp.float32)
    prepared = (
        w1.astype(COMPUTE_DTYPE), b1.astype(jnp.float32),
        w2.astype(COMPUTE_DTYPE), b2.astype(jnp.float32),
        w3.astype(COMPUTE_DTYPE), b3.astype(jnp.float32),
        w4.astype(COMPUTE_DTYPE), b4.astype(jnp.float32),
        w5p, b5p,
    )
    return prepared, n_z


@functools.partial(jax.jit, static_argnames=("n_z", "tile_m"))
def encoder_forward(x, prepared, *, n_z, tile_m=128):
    """x: [B, n_input] float32 (unpadded, uncast); prepared: from prepare_encoder_params.

    tile_m (batch rows per grid step):
      * v5e: 128 (128-shaped matmuls already map perfectly onto the 4x128x128 MXU).
      * v6e: 256 at larger batches for better MXU M-occupancy (not 512: the f32
        (tile_m,128) activation tile alone costs tile_m/8 vregs).
      * v7x: keep the tile COUNT even so the "parallel" batch axis shards across
        both TensorCores (for B=256 that means tile_m=128, not 256).
    """
    B, n_in = x.shape
    n_pad = prepared[-1].shape[-1]          # lane-padded output width (multiple of 128)

    num_tiles = pl.cdiv(B, tile_m)
    b_pad = num_tiles * tile_m
    if b_pad != B:                           # static-shape decision; zero rows sliced off below
        x = jnp.pad(x, ((0, b_pad - B), (0, 0)))

    # Activations / output: tiled over the batch grid axis.
    # x last dim == full array dim, so the (8,128) rule is satisfied without padding.
    x_spec = pl.BlockSpec((tile_m, n_in), lambda i: (i, 0))
    out_spec = pl.BlockSpec((tile_m, n_pad), lambda i: (i, 0))

    def _const_spec(a):
        # Full-array block, constant index map -> fetched once, VMEM-resident
        # across all grid steps.  For scaled-up dim_h, budget VMEM explicitly
        # (these blocks are double-buffered by default): add
        # pipeline_mode=pl.Buffered(1) here and set vmem_limit_bytes below.
        return pl.BlockSpec(a.shape, lambda i: (0, 0))

    out_padded = pl.pallas_call(
        _encoder_kernel,
        out_shape=jax.ShapeDtypeStruct((b_pad, n_pad), OUT_STORE_DTYPE),
        grid=(num_tiles,),
        in_specs=[x_spec] + [_const_spec(a) for a in prepared],
        out_specs=out_spec,
        compiler_params=pltpu.CompilerParams(
            # Batch tiles are independent -> shard across TensorCores (v7x megacore).
            dimension_semantics=("parallel",),
        ),
    )(x, *prepared)

    # Slice off batch/lane padding; upcast the bf16 writeback for f32 callers.
    return out_padded[:B, :n_z].astype(jnp.float32)


# ----------------------------------------------------------------------------
# Parameter sampling (mirrors MLPLayer's reparameterization) + pure-JAX reference
# ----------------------------------------------------------------------------

def sample_mlp_layer_params(key, n_in, n_out):
    """W_mu, W_logsigma ~ 0.01*N(0,1); eps ~ N(0,1); W = W_mu + softplus(W_logsigma)*eps."""
    k = jax.random.split(key, 6)
    w_mu = 0.01 * jax.random.normal(k[0], (n_in, n_out), jnp.float32)
    w_logsigma = 0.01 * jax.random.normal(k[1], (n_in, n_out), jnp.float32)
    b_mu = 0.01 * jax.random.normal(k[2], (1, n_out), jnp.float32)
    b_logsigma = 0.01 * jax.random.normal(k[3], (1, n_out), jnp.float32)
    eps_w = jax.random.normal(k[4], (n_in, n_out), jnp.float32)
    eps_b = jax.random.normal(k[5], (1, n_out), jnp.float32)
    w = w_mu + jax.nn.softplus(w_logsigma) * eps_w
    b = b_mu + jax.nn.softplus(b_logsigma) * eps_b
    return w, b


def build_encoder_params(key, n_input, dim_h, n_z):
    dims = [(n_input, dim_h), (dim_h, dim_h), (dim_h, dim_h), (dim_h, dim_h), (dim_h, n_z)]
    keys = jax.random.split(key, len(dims))
    params = []
    for k, (ni, no) in zip(keys, dims):
        w, b = sample_mlp_layer_params(k, ni, no)
        params += [w, b]
    return tuple(params)


def encoder_reference(x, params, compute_dtype=jnp.float32):
    """Pure-JAX reference. With compute_dtype=bf16 it mirrors the kernel's matmul math
    (bf16 operands, f32 accumulation, f32 bias add)."""
    w1, b1, w2, b2, w3, b3, w4, b4, w5, b5 = params

    def lin(h, w, b):
        return jnp.dot(h.astype(compute_dtype), w.astype(compute_dtype),
                       preferred_element_type=jnp.float32) + b.astype(jnp.float32)

    h = jnp.maximum(lin(x, w1, b1), 0.0)
    h = jnp.maximum(lin(h, w2, b2), 0.0)
    h = jnp.maximum(lin(h, w3, b3), 0.0)
    h = jnp.maximum(lin(h, w4, b4), 0.0)
    return lin(h, w5, b5)


if __name__ == "__main__":
    # Shapes consistent with the module: n_input=64 (e.g. flattened 8x8),
    # dim_h=128, n_z=8. Batch 256 -> 2 tiles of 128 so the batch grid,
    # pipelining and (on v7x) both TensorCores are exercised.
    B, N_INPUT, DIM_H, N_Z = 256, 64, 128, 8

    root = jax.random.PRNGKey(0)
    kx, kp = jax.random.split(root)
    x = jax.random.normal(kx, (B, N_INPUT), jnp.float32)
    params = build_encoder_params(kp, N_INPUT, DIM_H, N_Z)

    # One-time prep (hoisted out of the hot path); reuse `prepared` across calls.
    prepared, n_z = prepare_encoder_params(params)

    out = jax.block_until_ready(encoder_forward(x, prepared, n_z=n_z, tile_m=128))
    assert out.shape == (B, N_Z), out.shape

    # Matched-precision reference: bf16 operands, f32 accumulation, bf16 writeback.
    ref = encoder_reference(x, params, compute_dtype=jnp.bfloat16)
    ref = ref.astype(OUT_STORE_DTYPE).astype(jnp.float32)
    rel_err = float(jnp.max(jnp.abs(out - ref)) / (jnp.max(jnp.abs(ref)) + 1e-6))
    assert rel_err < 1e-2, rel_err

    print("KERNEL_OK")
</pallas_src>

<mosaic_0001>
module attributes {stable_mosaic.version = 11 : i64} {
  func.func @_encoder_kernel(%arg0: i32, %arg1: memref<128x64xf32, #tpu.memory_space<vmem>>, %arg2: memref<64x128xbf16, #tpu.memory_space<vmem>>, %arg3: memref<1x128xf32, #tpu.memory_space<vmem>>, %arg4: memref<128x128xbf16, #tpu.memory_space<vmem>>, %arg5: memref<1x128xf32, #tpu.memory_space<vmem>>, %arg6: memref<128x128xbf16, #tpu.memory_space<vmem>>, %arg7: memref<1x128xf32, #tpu.memory_space<vmem>>, %arg8: memref<128x128xbf16, #tpu.memory_space<vmem>>, %arg9: memref<1x128xf32, #tpu.memory_space<vmem>>, %arg10: memref<128x128xbf16, #tpu.memory_space<vmem>>, %arg11: memref<1x128xf32, #tpu.memory_space<vmem>>, %arg12: memref<128x128xbf16, #tpu.memory_space<vmem>>) attributes {dimension_semantics = [#tpu.dimension_semantics<parallel>], iteration_bounds = array<i64: 2>, scalar_prefetch = 0 : i64, scratch_operands = 0 : i64, tpu.core_type = #tpu.core_type<tc>, window_params = [{transform_indices = @transform_0, window_bounds = array<i64: 128, 64>}, {pipeline_mode = #tpu.pipeline_mode<synchronous>, transform_indices = @transform_1, window_bounds = array<i64: 64, 128>}, {pipeline_mode = #tpu.pipeline_mode<synchronous>, transform_indices = @transform_2, window_bounds = array<i64: 1, 128>}, {pipeline_mode = #tpu.pipeline_mode<synchronous>, transform_indices = @transform_3, window_bounds = array<i64: 128, 128>}, {pipeline_mode = #tpu.pipeline_mode<synchronous>, transform_indices = @transform_4, window_bounds = array<i64: 1, 128>}, {pipeline_mode = #tpu.pipeline_mode<synchronous>, transform_indices = @transform_5, window_bounds = array<i64: 128, 128>}, {pipeline_mode = #tpu.pipeline_mode<synchronous>, transform_indices = @transform_6, window_bounds = array<i64: 1, 128>}, {pipeline_mode = #tpu.pipeline_mode<synchronous>, transform_indices = @transform_7, window_bounds = array<i64: 128, 128>}, {pipeline_mode = #tpu.pipeline_mode<synchronous>, transform_indices = @transform_8, window_bounds = array<i64: 1, 128>}, {pipeline_mode = #tpu.pipeline_mode<synchronous>, transform_indices = @transform_9, window_bounds = array<i64: 128, 128>}, {pipeline_mode = #tpu.pipeline_mode<synchronous>, transform_indices = @transform_10, window_bounds = array<i64: 1, 128>}, {transform_indices = @transform_11, window_bounds = array<i64: 128, 128>}]} {
    %c0 = arith.constant 0 : index
    %c0_0 = arith.constant 0 : index
    %0 = vector.load %arg1[%c0, %c0_0] : memref<128x64xf32, #tpu.memory_space<vmem>>, vector<128x64xf32>
    %1 = arith.truncf %0 : vector<128x64xf32> to vector<128x64xbf16>
    %c0_1 = arith.constant 0 : index
    %c0_2 = arith.constant 0 : index
    %2 = vector.load %arg2[%c0_1, %c0_2] : memref<64x128xbf16, #tpu.memory_space<vmem>>, vector<64x128xbf16>
    %cst = arith.constant dense<0.000000e+00> : vector<128x128xf32>
    %3 = tpu.matmul %1, %2, %cst {dimension_numbers = #tpu.dot_dimension_numbers<[1], [0], [0], [1], [0, 0, 1, 1], [], []>} : vector<128x64xbf16>, vector<64x128xbf16>, vector<128x128xf32> -> vector<128x128xf32>
    %c0_3 = arith.constant 0 : index
    %c0_4 = arith.constant 0 : index
    %4 = vector.load %arg3[%c0_3, %c0_4] : memref<1x128xf32, #tpu.memory_space<vmem>>, vector<1x128xf32>
    %5 = vector.broadcast %4 : vector<1x128xf32> to vector<128x128xf32>
    %6 = arith.addf %3, %5 : vector<128x128xf32>
    %cst_5 = arith.constant 0.000000e+00 : f32
    %7 = vector.broadcast %cst_5 : f32 to vector<128x128xf32>
    %8 = arith.maximumf %6, %7 : vector<128x128xf32>
    %9 = arith.truncf %8 : vector<128x128xf32> to vector<128x128xbf16>
    %c0_6 = arith.constant 0 : index
    %c0_7 = arith.constant 0 : index
    %10 = vector.load %arg4[%c0_6, %c0_7] : memref<128x128xbf16, #tpu.memory_space<vmem>>, vector<128x128xbf16>
    %cst_8 = arith.constant dense<0.000000e+00> : vector<128x128xf32>
    %11 = tpu.matmul %9, %10, %cst_8 {dimension_numbers = #tpu.dot_dimension_numbers<[1], [0], [0], [1], [0, 0, 1, 1], [], []>} : vector<128x128xbf16>, vector<128x128xbf16>, vector<128x128xf32> -> vector<128x128xf32>
    %c0_9 = arith.constant 0 : index
    %c0_10 = arith.constant 0 : index
    %12 = vector.load %arg5[%c0_9, %c0_10] : memref<1x128xf32, #tpu.memory_space<vmem>>, vector<1x128xf32>
    %13 = vector.broadcast %12 : vector<1x128xf32> to vector<128x128xf32>
    %14 = arith.addf %11, %13 : vector<128x128xf32>
    %cst_11 = arith.constant 0.000000e+00 : f32
    %15 = vector.broadcast %cst_11 : f32 to vector<128x128xf32>
    %16 = arith.maximumf %14, %15 : vector<128x128xf32>
    %17 = arith.truncf %16 : vector<128x128xf32> to vector<128x128xbf16>
    %c0_12 = arith.constant 0 : index
    %c0_13 = arith.constant 0 : index
    %18 = vector.load %arg6[%c0_12, %c0_13] : memref<128x128xbf16, #tpu.memory_space<vmem>>, vector<128x128xbf16>
    %cst_14 = arith.constant dense<0.000000e+00> : vector<128x128xf32>
    %19 = tpu.matmul %17, %18, %cst_14 {dimension_numbers = #tpu.dot_dimension_numbers<[1], [0], [0], [1], [0, 0, 1, 1], [], []>} : vector<128x128xbf16>, vector<128x128xbf16>, vector<128x128xf32> -> vector<128x128xf32>
    %c0_15 = arith.constant 0 : index
    %c0_16 = arith.constant 0 : index
    %20 = vector.load %arg7[%c0_15, %c0_16] : memref<1x128xf32, #tpu.memory_space<vmem>>, vector<1x128xf32>
    %21 = vector.broadcast %20 : vector<1x128xf32> to vector<128x128xf32>
    %22 = arith.addf %19, %21 : vector<128x128xf32>
    %cst_17 = arith.constant 0.000000e+00 : f32
    %23 = vector.broadcast %cst_17 : f32 to vector<128x128xf32>
    %24 = arith.maximumf %22, %23 : vector<128x128xf32>
    %25 = arith.truncf %24 : vector<128x128xf32> to vector<128x128xbf16>
    %c0_18 = arith.constant 0 : index
    %c0_19 = arith.constant 0 : index
    %26 = vector.load %arg8[%c0_18, %c0_19] : memref<128x128xbf16, #tpu.memory_space<vmem>>, vector<128x128xbf16>
    %cst_20 = arith.constant dense<0.000000e+00> : vector<128x128xf32>
    %27 = tpu.matmul %25, %26, %cst_20 {dimension_numbers = #tpu.dot_dimension_numbers<[1], [0], [0], [1], [0, 0, 1, 1], [], []>} : vector<128x128xbf16>, vector<128x128xbf16>, vector<128x128xf32> -> vector<128x128xf32>
    %c0_21 = arith.constant 0 : index
    %c0_22 = arith.constant 0 : index
    %28 = vector.load %arg9[%c0_21, %c0_22] : memref<1x128xf32, #tpu.memory_space<vmem>>, vector<1x128xf32>
    %29 = vector.broadcast %28 : vector<1x128xf32> to vector<128x128xf32>
    %30 = arith.addf %27, %29 : vector<128x128xf32>
    %cst_23 = arith.constant 0.000000e+00 : f32
    %31 = vector.broadcast %cst_23 : f32 to vector<128x128xf32>
    %32 = arith.maximumf %30, %31 : vector<128x128xf32>
    %33 = arith.truncf %32 : vector<128x128xf32> to vector<128x128xbf16>
    %c0_24 = arith.constant 0 : index
    %c0_25 = arith.constant 0 : index
    %34 = vector.load %arg10[%c0_24, %c0_25] : memref<128x128xbf16, #tpu.memory_space<vmem>>, vector<128x128xbf16>
    %cst_26 = arith.constant dense<0.000000e+00> : vector<128x128xf32>
    %35 = tpu.matmul %33, %34, %cst_26 {dimension_numbers = #tpu.dot_dimension_numbers<[1], [0], [0], [1], [0, 0, 1, 1], [], []>} : vector<128x128xbf16>, vector<128x128xbf16>, vector<128x128xf32> -> vector<128x128xf32>
    %c0_27 = arith.constant 0 : index
    %c0_28 = arith.constant 0 : index
    %36 = vector.load %arg11[%c0_27, %c0_28] : memref<1x128xf32, #tpu.memory_space<vmem>>, vector<1x128xf32>
    %37 = vector.broadcast %36 : vector<1x128xf32> to vector<128x128xf32>
    %38 = arith.addf %35, %37 : vector<128x128xf32>
    %39 = arith.truncf %38 : vector<128x128xf32> to vector<128x128xbf16>
    %c0_29 = arith.constant 0 : index
    %c0_30 = arith.constant 0 : index
    %40 = vector.load %arg12[%c0_29, %c0_30] : memref<128x128xbf16, #tpu.memory_space<vmem>>, vector<128x128xbf16>
    tpu.vector_store %arg12[%c0_29, %c0_30], %39 {strides = array<i32>} : memref<128x128xbf16, #tpu.memory_space<vmem>>, vector<128x128xbf16>,
    return
  }
  func.func @transform_0(%arg0: i32) -> (i32, i32) {
    %c0_i32 = arith.constant 0 : i32
    %c0_i32_0 = arith.constant 0 : i32
    return %arg0, %c0_i32 : i32, i32
  }
  func.func @transform_1(%arg0: i32) -> (i32, i32) {
    %c0_i32 = arith.constant 0 : i32
    %c0_i32_0 = arith.constant 0 : i32
    %c0_i32_1 = arith.constant 0 : i32
    return %c0_i32, %c0_i32_0 : i32, i32
  }
  func.func @transform_2(%arg0: i32) -> (i32, i32) {
    %c0_i32 = arith.constant 0 : i32
    %c0_i32_0 = arith.constant 0 : i32
    %c0_i32_1 = arith.constant 0 : i32
    return %c0_i32, %c0_i32_0 : i32, i32
  }
  func.func @transform_3(%arg0: i32) -> (i32, i32) {
    %c0_i32 = arith.constant 0 : i32
    %c0_i32_0 = arith.constant 0 : i32
    %c0_i32_1 = arith.constant 0 : i32
    return %c0_i32, %c0_i32_0 : i32, i32
  }
  func.func @transform_4(%arg0: i32) -> (i32, i32) {
    %c0_i32 = arith.constant 0 : i32
    %c0_i32_0 = arith.constant 0 : i32
    %c0_i32_1 = arith.constant 0 : i32
    return %c0_i32, %c0_i32_0 : i32, i32
  }
  func.func @transform_5(%arg0: i32) -> (i32, i32) {
    %c0_i32 = arith.constant 0 : i32
    %c0_i32_0 = arith.constant 0 : i32
    %c0_i32_1 = arith.constant 0 : i32
    return %c0_i32, %c0_i32_0 : i32, i32
  }
  func.func @transform_6(%arg0: i32) -> (i32, i32) {
    %c0_i32 = arith.constant 0 : i32
    %c0_i32_0 = arith.constant 0 : i32
    %c0_i32_1 = arith.constant 0 : i32
    return %c0_i32, %c0_i32_0 : i32, i32
  }
  func.func @transform_7(%arg0: i32) -> (i32, i32) {
    %c0_i32 = arith.constant 0 : i32
    %c0_i32_0 = arith.constant 0 : i32
    %c0_i32_1 = arith.constant 0 : i32
    return %c0_i32, %c0_i32_0 : i32, i32
  }
  func.func @transform_8(%arg0: i32) -> (i32, i32) {
    %c0_i32 = arith.constant 0 : i32
    %c0_i32_0 = arith.constant 0 : i32
    %c0_i32_1 = arith.constant 0 : i32
    return %c0_i32, %c0_i32_0 : i32, i32
  }
  func.func @transform_9(%arg0: i32) -> (i32, i32) {
    %c0_i32 = arith.constant 0 : i32
    %c0_i32_0 = arith.constant 0 : i32
    %c0_i32_1 = arith.constant 0 : i32
    return %c0_i32, %c0_i32_0 : i32, i32
  }
  func.func @transform_10(%arg0: i32) -> (i32, i32) {
    %c0_i32 = arith.constant 0 : i32
    %c0_i32_0 = arith.constant 0 : i32
    %c0_i32_1 = arith.constant 0 : i32
    return %c0_i32, %c0_i32_0 : i32, i32
  }
  func.func @transform_11(%arg0: i32) -> (i32, i32) {
    %c0_i32 = arith.constant 0 : i32
    %c0_i32_0 = arith.constant 0 : i32
    return %arg0, %c0_i32 : i32, i32
  }
}

</mosaic_0001>

<llo_original>
// kernel: encoder_forward.1
$region0: #{encoder_forward.1}
  #allocation0 [shape = 'u32[]', space=smem, size = 0x4, offset = 0x4, fixed_abs, tag = 'smem constant byte address 0x4 - core index']
  #allocation1 [shape = 'u32[72,128]{1,0:T(1,128)}', space=vmem, size = 0x9000, scoped, tag = 'internal scratch']
  %s0 = inlined_call_operand.vmem [shape: f32[256,64], index: 0, kind: input, shape index: {}]
  %s1 = inlined_call_operand.vmem [shape: bf16[64,128], index: 1, kind: input, shape index: {}]
  %s2 = inlined_call_operand.vmem [shape: f32[1,128], index: 2, kind: input, shape index: {}]
  %s3 = inlined_call_operand.vmem [shape: bf16[128,128], index: 3, kind: input, shape index: {}]
  %s4 = inlined_call_operand.vmem [shape: f32[1,128], index: 4, kind: input, shape index: {}]
  %s5 = inlined_call_operand.vmem [shape: bf16[128,128], index: 5, kind: input, shape index: {}]
  %s6 = inlined_call_operand.vmem [shape: f32[1,128], index: 6, kind: input, shape index: {}]
  %s7 = inlined_call_operand.vmem [shape: bf16[128,128], index: 7, kind: input, shape index: {}]
  %s8 = inlined_call_operand.vmem [shape: f32[1,128], index: 8, kind: input, shape index: {}]
  %s9 = inlined_call_operand.vmem [shape: bf16[128,128], index: 9, kind: input, shape index: {}]
  %s10 = inlined_call_operand.vmem [shape: f32[1,128], index: 10, kind: input, shape index: {}]
  %s11 = inlined_call_operand.vmem [shape: bf16[256,128], index: 11, kind: output, shape index: {}]
  %s12 = sld [smem:[#allocation0]]
  $region77: #{encoder_forward.1} parent=0
    _
  %s14 = ssub.s32 1, %s12
  %s15 = scalar_select 0, %s14, %s12
  loop: start=0, step=1, limit=4
  $region2: #{encoder_forward.1} parent=0 // loop_pre_header
    _
  $region3: #{encoder_forward.1} parent=0 // loop_header
    %s17 = sphi 0, %s21
    %p18 = scmp.ge.s32.totalorder %s17, 4
    %s27 = sphi 0, %s29
    %s30 = sphi 0, %s27
    %s31 = sphi 0, %s30
    %s47 = sphi 0, %s31
    %s51 = sphi 0, %s51
    %s53 = sphi 0, %s51
    %s54 = sphi 0, %s53
    %s68 = sphi 0, %s54
    %s72 = sphi 0, %s72
    %s74 = sphi 0, %s72
    %s75 = sphi 0, %s74
    %s89 = sphi 0, %s75
    %s93 = sphi 0, %s93
    %s95 = sphi 0, %s93
    %s96 = sphi 0, %s95
    %s110 = sphi 0, %s96
    %s114 = sphi 0, %s114
    %s116 = sphi 0, %s114
    %s117 = sphi 0, %s116
    %s131 = sphi 0, %s117
    %s135 = sphi 0, %s135
    %s137 = sphi 0, %s135
    %s138 = sphi 0, %s137
    %s152 = sphi 0, %s138
    %s156 = sphi 0, %s156
    %s158 = sphi 0, %s156
    %s159 = sphi 0, %s158
    %s173 = sphi 0, %s159
    %s177 = sphi 0, %s177
    %s179 = sphi 0, %s177
    %s180 = sphi 0, %s179
    %s194 = sphi 0, %s180
    %s198 = sphi 0, %s198
    %s200 = sphi 0, %s198
    %s201 = sphi 0, %s200
    %s215 = sphi 0, %s201
    %s219 = sphi 0, %s219
    %s221 = sphi 0, %s219
    %s222 = sphi 0, %s221
    %s236 = sphi 0, %s222
    %s240 = sphi 0, %s240
    %s242 = sphi 0, %s240
    %s243 = sphi 0, %s242
    %s257 = sphi 0, %s243
    %s263 = sphi 0, %s265
    %s266 = sphi 0, %s263
    %s267 = sphi 0, %s266
    %s283 = sphi 0, %s267
  $region4: #{encoder_forward.1} parent=0 // loop_header_branch
    %20 = sbr.rel (%p18) target = $region8
  $region5: #{encoder_forward.1} parent=0 // loop_body
    %s22 = ssub.s32 %s17, 1
    %s23 = ssub.s32 %s17, 2
    %s24 = sadd.s32 %s17, 1
    %s25 = ssub.s32 %s17, %s24
    %p26 = scmp.eq.s32.totalorder %s25, 0
    %s28 = sadd.s32 %s27, 1
    %s29 = scalar_select %p26, %s27, %s28
    %p32 = pneg %p26
    %p33 = scmp.eq.s32.totalorder %s17, 1
    %p34 = por %p32, %p33
    %p35 = scmp.ne.s32.totalorder %s27, %s30
    %p36 = scmp.eq.s32.totalorder %s17, 0
    %p37 = por %p35, %p36
    %p38 = scmp.ne.s32.totalorder %s27, %s30
    %p39 = scmp.eq.s32.totalorder %s22, 1
    %p40 = por %p38, %p39
    %p41 = scmp.ne.s32.totalorder %s30, %s31
    %p42 = scmp.eq.s32.totalorder %s22, 0
    %p43 = por %p41, %p42
    %p44 = scmp.ne.s32.totalorder %s30, %s31
    %p45 = scmp.eq.s32.totalorder %s23, 1
    %p46 = por %p44, %p45
    %p48 = scmp.ne.s32.totalorder %s31, %s47
    %p49 = scmp.eq.s32.totalorder %s23, 0
    %p50 = por %p48, %p49
    %s52 = sadd.s32 %s51, 1
    %p55 = scmp.eq.s32.totalorder %s17, 1
    %p56 = scmp.ne.s32.totalorder %s51, %s53
    %p57 = scmp.eq.s32.totalorder %s17, 0
    %p58 = por %p56, %p57
    %p59 = scmp.ne.s32.totalorder %s51, %s53
    %p60 = scmp.eq.s32.totalorder %s22, 1
    %p61 = por %p59, %p60
    %p62 = scmp.ne.s32.totalorder %s53, %s54
    %p63 = scmp.eq.s32.totalorder %s22, 0
    %p64 = por %p62, %p63
    %p65 = scmp.ne.s32.totalorder %s53, %s54
    %p66 = scmp.eq.s32.totalorder %s23, 1
    %p67 = por %p65, %p66
    %p69 = scmp.ne.s32.totalorder %s54, %s68
    %p70 = scmp.eq.s32.totalorder %s23, 0
    %p71 = por %p69, %p70
    %s73 = sadd.s32 %s72, 1
    %p76 = scmp.eq.s32.totalorder %s17, 1
    %p77 = scmp.ne.s32.totalorder %s72, %s74
    %p78 = scmp.eq.s32.totalorder %s17, 0
    %p79 = por %p77, %p78
    %p80 = scmp.ne.s32.totalorder %s72, %s74
    %p81 = scmp.eq.s32.totalorder %s22, 1
    %p82 = por %p80, %p81
    %p83 = scmp.ne.s32.totalorder %s74, %s75
    %p84 = scmp.eq.s32.totalorder %s22, 0
    %p85 = por %p83, %p84
    %p86 = scmp.ne.s32.totalorder %s74, %s75
    %p87 = scmp.eq.s32.totalorder %s23, 1
    %p88 = por %p86, %p87
    %p90 = scmp.ne.s32.totalorder %s75, %s89
    %p91 = scmp.eq.s32.totalorder %s23, 0
    %p92 = por %p90, %p91
    %s94 = sadd.s32 %s93, 1
    %p97 = scmp.eq.s32.totalorder %s17, 1
    %p98 = scmp.ne.s32.totalorder %s93, %s95
    %p99 = scmp.eq.s32.totalorder %s17, 0
    %p100 = por %p98, %p99
    %p101 = scmp.ne.s32.totalorder %s93, %s95
    %p102 = scmp.eq.s32.totalorder %s22, 1
    %p103 = por %p101, %p102
    %p104 = scmp.ne.s32.totalorder %s95, %s96
    %p105 = scmp.eq.s32.totalorder %s22, 0
    %p106 = por %p104, %p105
    %p107 = scmp.ne.s32.totalorder %s95, %s96
    %p108 = scmp.eq.s32.totalorder %s23, 1
    %p109 = por %p107, %p108
    %p111 = scmp.ne.s32.totalorder %s96, %s110
    %p112 = scmp.eq.s32.totalorder %s23, 0
    %p113 = por %p111, %p112
    %s115 = sadd.s32 %s114, 1
    %p118 = scmp.eq.s32.totalorder %s17, 1
    %p119 = scmp.ne.s32.totalorder %s114, %s116
    %p120 = scmp.eq.s32.totalorder %s17, 0
    %p121 = por %p119, %p120
    %p122 = scmp.ne.s32.totalorder %s114, %s116
    %p123 = scmp.eq.s32.totalorder %s22, 1
    %p124 = por %p122, %p123
    %p125 = scmp.ne.s32.totalorder %s116, %s117
    %p126 = scmp.eq.s32.totalorder %s22, 0
    %p127 = por %p125, %p126
    %p128 = scmp.ne.s32.totalorder %s116, %s117
    %p129 = scmp.eq.s32.totalorder %s23, 1
    %p130 = por %p128, %p129
    %p132 = scmp.ne.s32.totalorder %s117, %s131
    %p133 = scmp.eq.s32.totalorder %s23, 0
    %p134 = por %p132, %p133
    %s136 = sadd.s32 %s135, 1
    %p139 = scmp.eq.s32.totalorder %s17, 1
    %p140 = scmp.ne.s32.totalorder %s135, %s137
    %p141 = scmp.eq.s32.totalorder %s17, 0
    %p142 = por %p140, %p141
    %p143 = scmp.ne.s32.totalorder %s135, %s137
    %p144 = scmp.eq.s32.totalorder %s22, 1
    %p145 = por %p143, %p144
    %p146 = scmp.ne.s32.totalorder %s137, %s138
    %p147 = scmp.eq.s32.totalorder %s22, 0
    %p148 = por %p146, %p147
    %p149 = scmp.ne.s32.totalorder %s137, %s138
    %p150 = scmp.eq.s32.totalorder %s23, 1
    %p151 = por %p149, %p150
    %p153 = scmp.ne.s32.totalorder %s138, %s152
    %p154 = scmp.eq.s32.totalorder %s23, 0
    %p155 = por %p153, %p154
    %s157 = sadd.s32 %s156, 1
    %p160 = scmp.eq.s32.totalorder %s17, 1
    %p161 = scmp.ne.s32.totalorder %s156, %s158
    %p162 = scmp.eq.s32.totalorder %s17, 0
    %p163 = por %p161, %p162
    %p164 = scmp.ne.s32.totalorder %s156, %s158
    %p165 = scmp.eq.s32.totalorder %s22, 1
    %p166 = por %p164, %p165
    %p167 = scmp.ne.s32.totalorder %s158, %s159
    %p168 = scmp.eq.s32.totalorder %s22, 0
    %p169 = por %p167, %p168
    %p170 = scmp.ne.s32.totalorder %s158, %s159
    %p171 = scmp.eq.s32.totalorder %s23, 1
    %p172 = por %p170, %p171
    %p174 = scmp.ne.s32.totalorder %s159, %s173
    %p175 = scmp.eq.s32.totalorder %s23, 0
    %p176 = por %p174, %p175
    %s178 = sadd.s32 %s177, 1
    %p181 = scmp.eq.s32.totalorder %s17, 1
    %p182 = scmp.ne.s32.totalorder %s177, %s179
    %p183 = scmp.eq.s32.totalorder %s17, 0
    %p184 = por %p182, %p183
    %p185 = scmp.ne.s32.totalorder %s177, %s179
    %p186 = scmp.eq.s32.totalorder %s22, 1
    %p187 = por %p185, %p186
    %p188 = scmp.ne.s32.totalorder %s179, %s180
    %p189 = scmp.eq.s32.totalorder %s22, 0
    %p190 = por %p188, %p189
    %p191 = scmp.ne.s32.totalorder %s179, %s180
    %p192 = scmp.eq.s32.totalorder %s23, 1
    %p193 = por %p191, %p192
    %p195 = scmp.ne.s32.totalorder %s180, %s194
    %p196 = scmp.eq.s32.totalorder %s23, 0
    %p197 = por %p195, %p196
    %s199 = sadd.s32 %s198, 1
    %p202 = scmp.eq.s32.totalorder %s17, 1
    %p203 = scmp.ne.s32.totalorder %s198, %s200
    %p204 = scmp.eq.s32.totalorder %s17, 0
    %p205 = por %p203, %p204
    %p206 = scmp.ne.s32.totalorder %s198, %s200
    %p207 = scmp.eq.s32.totalorder %s22, 1
    %p208 = por %p206, %p207
    %p209 = scmp.ne.s32.totalorder %s200, %s201
    %p210 = scmp.eq.s32.totalorder %s22, 0
    %p211 = por %p209, %p210
    %p212 = scmp.ne.s32.totalorder %s200, %s201
    %p213 = scmp.eq.s32.totalorder %s23, 1
    %p214 = por %p212, %p213
    %p216 = scmp.ne.s32.totalorder %s201, %s215
    %p217 = scmp.eq.s32.totalorder %s23, 0
    %p218 = por %p216, %p217
    %s220 = sadd.s32 %s219, 1
    %p223 = scmp.eq.s32.totalorder %s17, 1
    %p224 = scmp.ne.s32.totalorder %s219, %s221
    %p225 = scmp.eq.s32.totalorder %s17, 0
    %p226 = por %p224, %p225
    %p227 = scmp.ne.s32.totalorder %s219, %s221
    %p228 = scmp.eq.s32.totalorder %s22, 1
    %p229 = por %p227, %p228
    %p230 = scmp.ne.s32.totalorder %s221, %s222
    %p231 = scmp.eq.s32.totalorder %s22, 0
    %p232 = por %p230, %p231
    %p233 = scmp.ne.s32.totalorder %s221, %s222
    %p234 = scmp.eq.s32.totalorder %s23, 1
    %p235 = por %p233, %p234
    %p237 = scmp.ne.s32.totalorder %s222, %s236
    %p238 = scmp.eq.s32.totalorder %s23, 0
    %p239 = por %p237, %p238
    %s241 = sadd.s32 %s240, 1
    %p244 = scmp.eq.s32.totalorder %s17, 1
    %p245 = scmp.ne.s32.totalorder %s240, %s242
    %p246 = scmp.eq.s32.totalorder %s17, 0
    %p247 = por %p245, %p246
    %p248 = scmp.ne.s32.totalorder %s240, %s242
    %p249 = scmp.eq.s32.totalorder %s22, 1
    %p250 = por %p248, %p249
    %p251 = scmp.ne.s32.totalorder %s242, %s243
    %p252 = scmp.eq.s32.totalorder %s22, 0
    %p253 = por %p251, %p252
    %p254 = scmp.ne.s32.totalorder %s242, %s243
    %p255 = scmp.eq.s32.totalorder %s23, 1
    %p256 = por %p254, %p255
    %p258 = scmp.ne.s32.totalorder %s243, %s257
    %p259 = scmp.eq.s32.totalorder %s23, 0
    %p260 = por %p258, %p259
    %s261 = ssub.s32 %s17, %s24
    %p262 = scmp.eq.s32.totalorder %s261, 0
    %s264 = sadd.s32 %s263, 1
    %s265 = scalar_select %p262, %s263, %s264
    %p268 = pneg %p262
    %p269 = scmp.eq.s32.totalorder %s17, 1
    %p270 = por %p268, %p269
    %p271 = scmp.ne.s32.totalorder %s263, %s266
    %p272 = scmp.eq.s32.totalorder %s17, 0
    %p273 = por %p271, %p272
    %p274 = scmp.ne.s32.totalorder %s263, %s266
    %p275 = scmp.eq.s32.totalorder %s22, 1
    %p276 = por %p274, %p275
    %p277 = scmp.ne.s32.totalorder %s266, %s267
    %p278 = scmp.eq.s32.totalorder %s22, 0
    %p279 = por %p277, %p278
    %p280 = scmp.ne.s32.totalorder %s266, %s267
    %p281 = scmp.eq.s32.totalorder %s23, 1
    %p282 = por %p280, %p281
    %p284 = scmp.ne.s32.totalorder %s267, %s283
    %p285 = scmp.eq.s32.totalorder %s23, 0
    %p286 = por %p284, %p285
    %p287 = scmp.le.s32.totalorder 1, %s17
    %p288 = scmp.lt.s32.totalorder %s17, 3
    %p289 = pnand %p287, %p288
    %p290 = pneg %p289
    // Predicated region
    $region9: #{encoder_forward.1} parent=5 // pred_check
      _
    $region10: #{encoder_forward.1} parent=5 // pred_check_branch
      %292 = sbr.rel (%p289) target = $region12
    $region11: #{encoder_forward.1} parent=5 // pred_region
      %s293 = ssub.s32 %s17, 1
      // Predicated region
      $region13: #{encoder_forward.1} parent=11 // pred_check
        %p294 = pneg %p64
      $region14: #{encoder_forward.1} parent=11 // pred_check_branch
        %296 = sbr.rel (%p294) target = $region16
      $region15: #{encoder_forward.1} parent=11 // pred_region
        _
      $region16: #{encoder_forward.1} parent=11 // pred_fallthru
        _
      // Predicated region
      $region17: #{encoder_forward.1} parent=11 // pred_check
        %p297 = pneg %p85
      $region18: #{encoder_forward.1} parent=11 // pred_check_branch
        %299 = sbr.rel (%p297) target = $region20
      $region19: #{encoder_forward.1} parent=11 // pred_region
        _
      $region20: #{encoder_forward.1} parent=11 // pred_fallthru
        _
      // Predicated region
      $region21: #{encoder_forward.1} parent=11 // pred_check
        %p300 = pneg %p106
      $region22: #{encoder_forward.1} parent=11 // pred_check_branch
        %302 = sbr.rel (%p300) target = $region24
      $region23: #{encoder_forward.1} parent=11 // pred_region
        _
      $region24: #{encoder_forward.1} parent=11 // pred_fallthru
        _
      // Predicated region
      $region25: #{encoder_forward.1} parent=11 // pred_check
        %p303 = pneg %p127
      $region26: #{encoder_forward.1} parent=11 // pred_check_branch
        %305 = sbr.rel (%p303) target = $region28
      $region27: #{encoder_forward.1} parent=11 // pred_region
        _
      $region28: #{encoder_forward.1} parent=11 // pred_fallthru
        _
      // Predicated region
      $region29: #{encoder_forward.1} parent=11 // pred_check
        %p306 = pneg %p148
      $region30: #{encoder_forward.1} parent=11 // pred_check_branch
        %308 = sbr.rel (%p306) target = $region32
      $region31: #{encoder_forward.1} parent=11 // pred_region
        _
      $region32: #{encoder_forward.1} parent=11 // pred_fallthru
        _
      // Predicated region
      $region33: #{encoder_forward.1} parent=11 // pred_check
        %p309 = pneg %p169
      $region34: #{encoder_forward.1} parent=11 // pred_check_branch
        %311 = sbr.rel (%p309) target = $region36
      $region35: #{encoder_forward.1} parent=11 // pred_region
        _
      $region36: #{encoder_forward.1} parent=11 // pred_fallthru
        _
      // Predicated region
      $region37: #{encoder_forward.1} parent=11 // pred_check
        %p312 = pneg %p190
      $region38: #{encoder_forward.1} parent=11 // pred_check_branch
        %314 = sbr.rel (%p312) target = $region40
      $region39: #{encoder_forward.1} parent=11 // pred_region
        _
      $region40: #{encoder_forward.1} parent=11 // pred_fallthru
        _
      // Predicated region
      $region41: #{encoder_forward.1} parent=11 // pred_check
        %p315 = pneg %p211
      $region42: #{encoder_forward.1} parent=11 // pred_check_branch
        %317 = sbr.rel (%p315) target = $region44
      $region43: #{encoder_forward.1} parent=11 // pred_region
        _
      $region44: #{encoder_forward.1} parent=11 // pred_fallthru
        _
      // Predicated region
      $region45: #{encoder_forward.1} parent=11 // pred_check
        %p318 = pneg %p232
      $region46: #{encoder_forward.1} parent=11 // pred_check_branch
        %320 = sbr.rel (%p318) target = $region48
      $region47: #{encoder_forward.1} parent=11 // pred_region
        _
      $region48: #{encoder_forward.1} parent=11 // pred_fallthru
        _
      // Predicated region
      $region49: #{encoder_forward.1} parent=11 // pred_check
        %p321 = pneg %p253
      $region50: #{encoder_forward.1} parent=11 // pred_check_branch
        %323 = sbr.rel (%p321) target = $region52
      $region51: #{encoder_forward.1} parent=11 // pred_region
        _
      $region52: #{encoder_forward.1} parent=11 // pred_fallthru
        _
    $region12: #{encoder_forward.1} parent=5 // pred_fallthru
      _
    %p324 = scmp.lt.s32.totalorder %s17, 2
    // Predicated region
    $region53: #{encoder_forward.1} parent=5 // pred_check
      %p325 = pneg %p324
    $region54: #{encoder_forward.1} parent=5 // pred_check_branch
      %327 = sbr.rel (%p325) target = $region56
    $region55: #{encoder_forward.1} parent=5 // pred_region
      // Predicated region
      $region57: #{encoder_forward.1} parent=55 // pred_check
        %p328 = pneg %p37
      $region58: #{encoder_forward.1} parent=55 // pred_check_branch
        %330 = sbr.rel (%p328) target = $region60
      $region59: #{encoder_forward.1} parent=55 // pred_region
        %s331 = smul.u32 16, %s17
        %p332 = scmp.lt.s32.totalorder %s331, 31
        %s333 = scalar_select %p332, %s331, 31
        %s334 = smul.addr %s333, 8
        %s335 = scalar_lea.vmem %s0, %s334
        %s336 = smul.u32 16, %s17
      $region60: #{encoder_forward.1} parent=55 // pred_fallthru
        _
    $region56: #{encoder_forward.1} parent=5 // pred_fallthru
      _
    %p337 = scmp.le.s32.totalorder 1, %s17
    %p338 = scmp.lt.s32.totalorder %s17, 3
    %p339 = pnand %p337, %p338
    %p340 = pneg %p339
    // Predicated region
    $region61: #{encoder_forward.1} parent=5 // pred_check
      _
    $region62: #{encoder_forward.1} parent=5 // pred_check_branch
      %342 = sbr.rel (%p339) target = $region64
    $region63: #{encoder_forward.1} parent=5 // pred_region
      %s343 = ssub.s32 %s17, 1
      %s344 = smul.u32 16, %s22
      %p345 = scmp.lt.s32.totalorder %s344, 31
      %s346 = scalar_select %p345, %s344, 31
      %s347 = smul.addr %s346, 8
      %s348 = scalar_lea.vmem %s0, %s347
      %p349 = pneg %p43
      %p350 = pneg %p40
      %p351 = pneg %p64
      %p352 = pneg %p61
      %p353 = pneg %p85
      %p354 = pneg %p82
      %p355 = pneg %p106
      %p356 = pneg %p103
      %p357 = pneg %p127
      %p358 = pneg %p124
      %p359 = pneg %p148
      %p360 = pneg %p145
      %p361 = pneg %p169
      %p362 = pneg %p166
      %p363 = pneg %p190
      %p364 = pneg %p187
      %p365 = pneg %p211
      %p366 = pneg %p208
      %p367 = pneg %p232
      %p368 = pneg %p229
      %p369 = pneg %p253
      %p370 = pneg %p250
      %p371 = pneg %p279
      %p372 = pneg %p276
      %s373 = smul.u32 16, %s22
      %p374 = scmp.lt.s32.totalorder %s373, 31
      %s375 = scalar_select %p374, %s373, 31
      %s376 = smul.addr %s375, 4
      %s377 = scalar_lea.vmem %s11, %s376
      %s378 = smul.u32 16, %s22
      %p379 = scmp.lt.s32.totalorder %s378, 31
      %s380 = scalar_select %p379, %s378, 31
      %s381 = smul.addr %s380, 8
      %s382 = scalar_lea.vmem %s0, %s381
      %s383 = smul.u32 16, %s22
      %s384 = smul.u32 16, %s22
      %p385 = scmp.lt.s32.totalorder %s384, 31
      %s386 = scalar_select %p385, %s384, 31
      %s387 = smul.addr %s386, 4
      %s388 = scalar_lea.vmem %s11, %s387
      %s389 = smul.u32 16, %s22
      %v391 = vld [vmem:[%s382] sm:$0xff]
      %v392 = vld [vmem:[%s382 + $0x8] sm:$0xff]
      %v393 = vld [vmem:[%s382 + $0x10] sm:$0xff]
      %v394 = vld [vmem:[%s382 + $0x18] sm:$0xff]
      %v395 = vld [vmem:[%s382 + $0x20] sm:$0xff]
      %v396 = vld [vmem:[%s382 + $0x28] sm:$0xff]
      %v397 = vld [vmem:[%s382 + $0x30] sm:$0xff]
      %v398 = vld [vmem:[%s382 + $0x38] sm:$0xff]
      %v399 = vld [vmem:[%s382 + $0x40] sm:$0xff]
      %v400 = vld [vmem:[%s382 + $0x48] sm:$0xff]
      %v401 = vld [vmem:[%s382 + $0x50] sm:$0xff]
      %v402 = vld [vmem:[%s382 + $0x58] sm:$0xff]
      %v403 = vld [vmem:[%s382 + $0x60] sm:$0xff]
      %v404 = vld [vmem:[%s382 + $0x68] sm:$0xff]
      %v405 = vld [vmem:[%s382 + $0x70] sm:$0xff]
      %v406 = vld [vmem:[%s382 + $0x78] sm:$0xff]
      %v407 = vpack.c.bf16 %v392, %v391
      %v408 = vpack.c.bf16 %v394, %v393
      %v409 = vpack.c.bf16 %v396, %v395
      %v410 = vpack.c.bf16 %v398, %v397
      %v411 = vpack.c.bf16 %v400, %v399
      %v412 = vpack.c.bf16 %v402, %v401
      %v413 = vpack.c.bf16 %v404, %v403
      %v414 = vpack.c.bf16 %v406, %v405
      %v415 = vld [vmem:[%s1] sm:$0xf]
      %v416 = vld [vmem:[%s1 + $0x4] sm:$0xf]
      %v417 = vld [vmem:[%s1 + $0x8] sm:$0xf]
      %v418 = vld [vmem:[%s1 + $0xc] sm:$0xf]
      %v419 = vld [vmem:[%s1 + $0x10] sm:$0xf]
      %v420 = vld [vmem:[%s1 + $0x14] sm:$0xf]
      %v421 = vld [vmem:[%s1 + $0x18] sm:$0xf]
      %v422 = vld [vmem:[%s1 + $0x1c] sm:$0xf]
      %v423 = vld [vmem:[%s2] sm:$0x1]
      %v425 = vperm.slane %v423, 0
      %v435 = vunpack.c.l.b16 %v415
      %v436 = vunpack.c.l.b16 %v416
      %v437 = vunpack.c.l.b16 %v417
      %v438 = vunpack.c.l.b16 %v418
      %v439 = vunpack.c.l.b16 %v419
      %v440 = vunpack.c.l.b16 %v420
      %v441 = vunpack.c.l.b16 %v421
      %v442 = vunpack.c.l.b16 %v422
      %v443 = vpack.c.b16 %v436, %v435
      %v444 = vpack.c.b16 %v438, %v437
      %v445 = vpack.c.b16 %v440, %v439
      %v446 = vpack.c.b16 %v442, %v441
      %vm451 = vcmask 523264
      %v453 = vsel %vm451, %v407, 0
      %v456 = vsel %vm451, %v408, 0
      %v459 = vsel %vm451, %v409, 0
      %v462 = vsel %vm451, %v410, 0
      %v465 = vsel %vm451, %v411, 0
      %v468 = vsel %vm451, %v412, 0
      %v471 = vsel %vm451, %v413, 0
      %v474 = vsel %vm451, %v414, 0
      %476 = vmatpush.bf16.msra.mxu0 0
      %477 = vmatpush.bf16.msra.mxu0 0
      %478 = vmatpush.bf16.msra.mxu0 0
      %479 = vmatpush.bf16.msra.mxu0 0
      %480 = vmatpush.bf16.msra.mxu0 %v446
      %481 = vmatpush.bf16.msra.mxu0 %v445
      %482 = vmatpush.bf16.msra.mxu0 %v444
      %483 = vmatpush.bf16.msra.mxu0 %v443
      %484 = vmatmul.bf16.gmra.mxu0 %v453
      %v485 = vpop.f32.mrf.mxu0
      %v486 = vadd.f32 %v425, %v485
      %v487 = vpop.f32.mrf.mxu0
      %v488 = vadd.f32 %v425, %v487
      %489 = vmatmul.bf16.gmra.mxu0 %v456
      %v490 = vpop.f32.mrf.mxu0
      %v491 = vadd.f32 %v425, %v490
      %v492 = vpop.f32.mrf.mxu0
      %v493 = vadd.f32 %v425, %v492
      %494 = vmatmul.bf16.gmra.mxu0 %v459
      %v495 = vpop.f32.mrf.mxu0
      %v496 = vadd.f32 %v425, %v495
      %v497 = vpop.f32.mrf.mxu0
      %v498 = vadd.f32 %v425, %v497
      %499 = vmatmul.bf16.gmra.mxu0 %v462
      %v500 = vpop.f32.mrf.mxu0
      %v501 = vadd.f32 %v425, %v500
      %v502 = vpop.f32.mrf.mxu0
      %v503 = vadd.f32 %v425, %v502
      %504 = vmatmul.bf16.gmra.mxu0 %v465
      %v505 = vpop.f32.mrf.mxu0
      %v506 = vadd.f32 %v425, %v505
      %v507 = vpop.f32.mrf.mxu0
      %v508 = vadd.f32 %v425, %v507
      %509 = vmatmul.bf16.gmra.mxu0 %v468
      %v510 = vpop.f32.mrf.mxu0
      %v511 = vadd.f32 %v425, %v510
      %v512 = vpop.f32.mrf.mxu0
      %v513 = vadd.f32 %v425, %v512
      %514 = vmatmul.bf16.gmra.mxu0 %v471
      %v515 = vpop.f32.mrf.mxu0
      %v516 = vadd.f32 %v425, %v515
      %v517 = vpop.f32.mrf.mxu0
      %v518 = vadd.f32 %v425, %v517
      %519 = vmatmul.bf16.gmra.mxu0 %v474
      %v520 = vpop.f32.mrf.mxu0
      %v521 = vadd.f32 %v425, %v520
      %v522 = vpop.f32.mrf.mxu0
      %v523 = vadd.f32 %v425, %v522
      %524 = vdwg.mxu0
      %v525 = vmax.f32 %v486, 0.0
      %v526 = vmax.f32 %v488, 0.0
      %v527 = vmax.f32 %v491, 0.0
      %v528 = vmax.f32 %v493, 0.0
      %v529 = vmax.f32 %v496, 0.0
      %v530 = vmax.f32 %v498, 0.0
      %v531 = vmax.f32 %v501, 0.0
      %v532 = vmax.f32 %v503, 0.0
      %v533 = vmax.f32 %v506, 0.0
      %v534 = vmax.f32 %v508, 0.0
      %v535 = vmax.f32 %v511, 0.0
      %v536 = vmax.f32 %v513, 0.0
      %v537 = vmax.f32 %v516, 0.0
      %v538 = vmax.f32 %v518, 0.0
      %v539 = vmax.f32 %v521, 0.0
      %v540 = vmax.f32 %v523, 0.0
      %v541 = vpack.c.bf16 %v526, %v525
      %v542 = vpack.c.bf16 %v528, %v527
      %v543 = vpack.c.bf16 %v530, %v529
      %v544 = vpack.c.bf16 %v532, %v531
      %v545 = vpack.c.bf16 %v534, %v533
      %v546 = vpack.c.bf16 %v536, %v535
      %v547 = vpack.c.bf16 %v538, %v537
      %v548 = vpack.c.bf16 %v540, %v539
      %v549 = vld [vmem:[%s3] sm:$0xf]
      %v550 = vld [vmem:[%s3 + $0x4] sm:$0xf]
      %v551 = vld [vmem:[%s3 + $0x8] sm:$0xf]
      %v552 = vld [vmem:[%s3 + $0xc] sm:$0xf]
      %v553 = vld [vmem:[%s3 + $0x10] sm:$0xf]
      %v554 = vld [vmem:[%s3 + $0x14] sm:$0xf]
      %v555 = vld [vmem:[%s3 + $0x18] sm:$0xf]
      %v556 = vld [vmem:[%s3 + $0x1c] sm:$0xf]
      %v557 = vld [vmem:[%s3 + $0x20] sm:$0xf]
      %v558 = vld [vmem:[%s3 + $0x24] sm:$0xf]
      %v559 = vld [vmem:[%s3 + $0x28] sm:$0xf]
      %v560 = vld [vmem:[%s3 + $0x2c] sm:$0xf]
      %v561 = vld [vmem:[%s3 + $0x30] sm:$0xf]
      %v562 = vld [vmem:[%s3 + $0x34] sm:$0xf]
      %v563 = vld [vmem:[%s3 + $0x38] sm:$0xf]
      %v564 = vld [vmem:[%s3 + $0x3c] sm:$0xf]
      %v565 = vld [vmem:[%s4] sm:$0x1]
      %v567 = vperm.slane %v565, 0
      %v585 = vunpack.c.l.b16 %v549
      %v586 = vunpack.c.l.b16 %v550
      %v587 = vunpack.c.l.b16 %v551
      %v588 = vunpack.c.l.b16 %v552
      %v589 = vunpack.c.l.b16 %v553
      %v590 = vunpack.c.l.b16 %v554
      %v591 = vunpack.c.l.b16 %v555
      %v592 = vunpack.c.l.b16 %v556
      %v593 = vunpack.c.l.b16 %v557
      %v594 = vunpack.c.l.b16 %v558
      %v595 = vunpack.c.l.b16 %v559
      %v596 = vunpack.c.l.b16 %v560
      %v597 = vunpack.c.l.b16 %v561
      %v598 = vunpack.c.l.b16 %v562
      %v599 = vunpack.c.l.b16 %v563
      %v600 = vunpack.c.l.b16 %v564
      %v601 = vpack.c.b16 %v586, %v585
      %v602 = vpack.c.b16 %v588, %v587
      %v603 = vpack.c.b16 %v590, %v589
      %v604 = vpack.c.b16 %v592, %v591
      %v605 = vpack.c.b16 %v594, %v593
      %v606 = vpack.c.b16 %v596, %v595
      %v607 = vpack.c.b16 %v598, %v597
      %v608 = vpack.c.b16 %v600, %v599
      %617 = vmatpush.bf16.msra.mxu0 %v608
      %618 = vmatpush.bf16.msra.mxu0 %v607
      %619 = vmatpush.bf16.msra.mxu0 %v606
      %620 = vmatpush.bf16.msra.mxu0 %v605
      %621 = vmatpush.bf16.msra.mxu0 %v604
      %622 = vmatpush.bf16.msra.mxu0 %v603
      %623 = vmatpush.bf16.msra.mxu0 %v602
      %624 = vmatpush.bf16.msra.mxu0 %v601
      %625 = vmatmul.bf16.gmra.mxu0 %v541
      %v626 = vpop.f32.mrf.mxu0
      %v627 = vadd.f32 %v567, %v626
      %v628 = vpop.f32.mrf.mxu0
      %v629 = vadd.f32 %v567, %v628
      %630 = vmatmul.bf16.gmra.mxu0 %v542
      %v631 = vpop.f32.mrf.mxu0
      %v632 = vadd.f32 %v567, %v631
      %v633 = vpop.f32.mrf.mxu0
      %v634 = vadd.f32 %v567, %v633
      %635 = vmatmul.bf16.gmra.mxu0 %v543
      %v636 = vpop.f32.mrf.mxu0
      %v637 = vadd.f32 %v567, %v636
      %v638 = vpop.f32.mrf.mxu0
      %v639 = vadd.f32 %v567, %v638
      %640 = vmatmul.bf16.gmra.mxu0 %v544
      %v641 = vpop.f32.mrf.mxu0
      %v642 = vadd.f32 %v567, %v641
      %v643 = vpop.f32.mrf.mxu0
      %v644 = vadd.f32 %v567, %v643
      %645 = vmatmul.bf16.gmra.mxu0 %v545
      %v646 = vpop.f32.mrf.mxu0
      %v647 = vadd.f32 %v567, %v646
      %v648 = vpop.f32.mrf.mxu0
      %v649 = vadd.f32 %v567, %v648
      %650 = vmatmul.bf16.gmra.mxu0 %v546
      %v651 = vpop.f32.mrf.mxu0
      %v652 = vadd.f32 %v567, %v651
      %v653 = vpop.f32.mrf.mxu0
      %v654 = vadd.f32 %v567, %v653
      %655 = vmatmul.bf16.gmra.mxu0 %v547
      %v656 = vpop.f32.mrf.mxu0
      %v657 = vadd.f32 %v567, %v656
      %v658 = vpop.f32.mrf.mxu0
      %v659 = vadd.f32 %v567, %v658
      %660 = vmatmul.bf16.gmra.mxu0 %v548
      %v661 = vpop.f32.mrf.mxu0
      %v662 = vadd.f32 %v567, %v661
      %v663 = vpop.f32.mrf.mxu0
      %v664 = vadd.f32 %v567, %v663
      %665 = vdwg.mxu0
      %v666 = vmax.f32 %v627, 0.0
      %v667 = vmax.f32 %v629, 0.0
      %v668 = vmax.f32 %v632, 0.0
      %v669 = vmax.f32 %v634, 0.0
      %v670 = vmax.f32 %v637, 0.0
      %v671 = vmax.f32 %v639, 0.0
      %v672 = vmax.f32 %v642, 0.0
      %v673 = vmax.f32 %v644, 0.0
      %v674 = vmax.f32 %v647, 0.0
      %v675 = vmax.f32 %v649, 0.0
      %v676 = vmax.f32 %v652, 0.0
      %v677 = vmax.f32 %v654, 0.0
      %v678 = vmax.f32 %v657, 0.0
      %v679 = vmax.f32 %v659, 0.0
      %v680 = vmax.f32 %v662, 0.0
      %v681 = vmax.f32 %v664, 0.0
      %v682 = vpack.c.bf16 %v667, %v666
      %v683 = vpack.c.bf16 %v669, %v668
      %v684 = vpack.c.bf16 %v671, %v670
      %v685 = vpack.c.bf16 %v673, %v672
      %v686 = vpack.c.bf16 %v675, %v674
      %v687 = vpack.c.bf16 %v677, %v676
      %v688 = vpack.c.bf16 %v679, %v678
      %v689 = vpack.c.bf16 %v681, %v680
      %v690 = vld [vmem:[%s5] sm:$0xf]
      %v691 = vld [vmem:[%s5 + $0x4] sm:$0xf]
      %v692 = vld [vmem:[%s5 + $0x8] sm:$0xf]
      %v693 = vld [vmem:[%s5 + $0xc] sm:$0xf]
      %v694 = vld [vmem:[%s5 + $0x10] sm:$0xf]
      %v695 = vld [vmem:[%s5 + $0x14] sm:$0xf]
      %v696 = vld [vmem:[%s5 + $0x18] sm:$0xf]
      %v697 = vld [vmem:[%s5 + $0x1c] sm:$0xf]
      %v698 = vld [vmem:[%s5 + $0x20] sm:$0xf]
      %v699 = vld [vmem:[%s5 + $0x24] sm:$0xf]
      %v700 = vld [vmem:[%s5 + $0x28] sm:$0xf]
      %v701 = vld [vmem:[%s5 + $0x2c] sm:$0xf]
      %v702 = vld [vmem:[%s5 + $0x30] sm:$0xf]
      %v703 = vld [vmem:[%s5 + $0x34] sm:$0xf]
      %v704 = vld [vmem:[%s5 + $0x38] sm:$0xf]
      %v705 = vld [vmem:[%s5 + $0x3c] sm:$0xf]
      %v706 = vld [vmem:[%s6] sm:$0x1]
      %v708 = vperm.slane %v706, 0
      %v726 = vunpack.c.l.b16 %v690
      %v727 = vunpack.c.l.b16 %v691
      %v728 = vunpack.c.l.b16 %v692
      %v729 = vunpack.c.l.b16 %v693
      %v730 = vunpack.c.l.b16 %v694
      %v731 = vunpack.c.l.b16 %v695
      %v732 = vunpack.c.l.b16 %v696
      %v733 = vunpack.c.l.b16 %v697
      %v734 = vunpack.c.l.b16 %v698
      %v735 = vunpack.c.l.b16 %v699
      %v736 = vunpack.c.l.b16 %v700
      %v737 = vunpack.c.l.b16 %v701
      %v738 = vunpack.c.l.b16 %v702
      %v739 = vunpack.c.l.b16 %v703
      %v740 = vunpack.c.l.b16 %v704
      %v741 = vunpack.c.l.b16 %v705
      %v742 = vpack.c.b16 %v727, %v726
      %v743 = vpack.c.b16 %v729, %v728
      %v744 = vpack.c.b16 %v731, %v730
      %v745 = vpack.c.b16 %v733, %v732
      %v746 = vpack.c.b16 %v735, %v734
      %v747 = vpack.c.b16 %v737, %v736
      %v748 = vpack.c.b16 %v739, %v738
      %v749 = vpack.c.b16 %v741, %v740
      %758 = vmatpush.bf16.msra.mxu0 %v749
      %759 = vmatpush.bf16.msra.mxu0 %v748
      %760 = vmatpush.bf16.msra.mxu0 %v747
      %761 = vmatpush.bf16.msra.mxu0 %v746
      %762 = vmatpush.bf16.msra.mxu0 %v745
      %763 = vmatpush.bf16.msra.mxu0 %v744
      %764 = vmatpush.bf16.msra.mxu0 %v743
      %765 = vmatpush.bf16.msra.mxu0 %v742
      %766 = vmatmul.bf16.gmra.mxu0 %v682
      %v767 = vpop.f32.mrf.mxu0
      %v768 = vadd.f32 %v708, %v767
      %v769 = vpop.f32.mrf.mxu0
      %v770 = vadd.f32 %v708, %v769
      %771 = vmatmul.bf16.gmra.mxu0 %v683
      %v772 = vpop.f32.mrf.mxu0
      %v773 = vadd.f32 %v708, %v772
      %v774 = vpop.f32.mrf.mxu0
      %v775 = vadd.f32 %v708, %v774
      %776 = vmatmul.bf16.gmra.mxu0 %v684
      %v777 = vpop.f32.mrf.mxu0
      %v778 = vadd.f32 %v708, %v777
      %v779 = vpop.f32.mrf.mxu0
      %v780 = vadd.f32 %v708, %v779
      %781 = vmatmul.bf16.gmra.mxu0 %v685
      %v782 = vpop.f32.mrf.mxu0
      %v783 = vadd.f32 %v708, %v782
      %v784 = vpop.f32.mrf.mxu0
      %v785 = vadd.f32 %v708, %v784
      %786 = vmatmul.bf16.gmra.mxu0 %v686
      %v787 = vpop.f32.mrf.mxu0
      %v788 = vadd.f32 %v708, %v787
      %v789 = vpop.f32.mrf.mxu0
      %v790 = vadd.f32 %v708, %v789
      %791 = vmatmul.bf16.gmra.mxu0 %v687
      %v792 = vpop.f32.mrf.mxu0
      %v793 = vadd.f32 %v708, %v792
      %v794 = vpop.f32.mrf.mxu0
      %v795 = vadd.f32 %v708, %v794
      %796 = vmatmul.bf16.gmra.mxu0 %v688
      %v797 = vpop.f32.mrf.mxu0
      %v798 = vadd.f32 %v708, %v797
      %v799 = vpop.f32.mrf.mxu0
      %v800 = vadd.f32 %v708, %v799
      %801 = vmatmul.bf16.gmra.mxu0 %v689
      %v802 = vpop.f32.mrf.mxu0
      %v803 = vadd.f32 %v708, %v802
      %v804 = vpop.f32.mrf.mxu0
      %v805 = vadd.f32 %v708, %v804
      %806 = vdwg.mxu0
      %v807 = vmax.f32 %v768, 0.0
      %v808 = vmax.f32 %v770, 0.0
      %v809 = vmax.f32 %v773, 0.0
      %v810 = vmax.f32 %v775, 0.0
      %v811 = vmax.f32 %v778, 0.0
      %v812 = vmax.f32 %v780, 0.0
      %v813 = vmax.f32 %v783, 0.0
      %v814 = vmax.f32 %v785, 0.0
      %v815 = vmax.f32 %v788, 0.0
      %v816 = vmax.f32 %v790, 0.0
      %v817 = vmax.f32 %v793, 0.0
      %v818 = vmax.f32 %v795, 0.0
      %v819 = vmax.f32 %v798, 0.0
      %v820 = vmax.f32 %v800, 0.0
      %v821 = vmax.f32 %v803, 0.0
      %v822 = vmax.f32 %v805, 0.0
      %v823 = vpack.c.bf16 %v808, %v807
      %v824 = vpack.c.bf16 %v810, %v809
      %v825 = vpack.c.bf16 %v812, %v811
      %v826 = vpack.c.bf16 %v814, %v813
      %v827 = vpack.c.bf16 %v816, %v815
      %v828 = vpack.c.bf16 %v818, %v817
      %v829 = vpack.c.bf16 %v820, %v819
      %v830 = vpack.c.bf16 %v822, %v821
      %v831 = vld [vmem:[%s7] sm:$0xf]
      %v832 = vld [vmem:[%s7 + $0x4] sm:$0xf]
      %v833 = vld [vmem:[%s7 + $0x8] sm:$0xf]
      %v834 = vld [vmem:[%s7 + $0xc] sm:$0xf]
      %v835 = vld [vmem:[%s7 + $0x10] sm:$0xf]
      %v836 = vld [vmem:[%s7 + $0x14] sm:$0xf]
      %v837 = vld [vmem:[%s7 + $0x18] sm:$0xf]
      %v838 = vld [vmem:[%s7 + $0x1c] sm:$0xf]
      %v839 = vld [vmem:[%s7 + $0x20] sm:$0xf]
      %v840 = vld [vmem:[%s7 + $0x24] sm:$0xf]
      %v841 = vld [vmem:[%s7 + $0x28] sm:$0xf]
      %v842 = vld [vmem:[%s7 + $0x2c] sm:$0xf]
      %v843 = vld [vmem:[%s7 + $0x30] sm:$0xf]
      %v844 = vld [vmem:[%s7 + $0x34] sm:$0xf]
      %v845 = vld [vmem:[%s7 + $0x38] sm:$0xf]
      %v846 = vld [vmem:[%s7 + $0x3c] sm:$0xf]
      %v847 = vld [vmem:[%s8] sm:$0x1]
      %v849 = vperm.slane %v847, 0
      %v867 = vunpack.c.l.b16 %v831
      %v868 = vunpack.c.l.b16 %v832
      %v869 = vunpack.c.l.b16 %v833
      %v870 = vunpack.c.l.b16 %v834
      %v871 = vunpack.c.l.b16 %v835
      %v872 = vunpack.c.l.b16 %v836
      %v873 = vunpack.c.l.b16 %v837
      %v874 = vunpack.c.l.b16 %v838
      %v875 = vunpack.c.l.b16 %v839
      %v876 = vunpack.c.l.b16 %v840
      %v877 = vunpack.c.l.b16 %v841
      %v878 = vunpack.c.l.b16 %v842
      %v879 = vunpack.c.l.b16 %v843
      %v880 = vunpack.c.l.b16 %v844
      %v881 = vunpack.c.l.b16 %v845
      %v882 = vunpack.c.l.b16 %v846
      %v883 = vpack.c.b16 %v868, %v867
      %v884 = vpack.c.b16 %v870, %v869
      %v885 = vpack.c.b16 %v872, %v871
      %v886 = vpack.c.b16 %v874, %v873
      %v887 = vpack.c.b16 %v876, %v875
      %v888 = vpack.c.b16 %v878, %v877
      %v889 = vpack.c.b16 %v880, %v879
      %v890 = vpack.c.b16 %v882, %v881
      %899 = vmatpush.bf16.msra.mxu0 %v890
      %900 = vmatpush.bf16.msra.mxu0 %v889
      %901 = vmatpush.bf16.msra.mxu0 %v888
      %902 = vmatpush.bf16.msra.mxu0 %v887
      %903 = vmatpush.bf16.msra.mxu0 %v886
      %904 = vmatpush.bf16.msra.mxu0 %v885
      %905 = vmatpush.bf16.msra.mxu0 %v884
      %906 = vmatpush.bf16.msra.mxu0 %v883
      %907 = vmatmul.bf16.gmra.mxu0 %v823
      %v908 = vpop.f32.mrf.mxu0
      %v909 = vadd.f32 %v849, %v908
      %v910 = vpop.f32.mrf.mxu0
      %v911 = vadd.f32 %v849, %v910
      %912 = vmatmul.bf16.gmra.mxu0 %v824
      %v913 = vpop.f32.mrf.mxu0
      %v914 = vadd.f32 %v849, %v913
      %v915 = vpop.f32.mrf.mxu0
      %v916 = vadd.f32 %v849, %v915
      %917 = vmatmul.bf16.gmra.mxu0 %v825
      %v918 = vpop.f32.mrf.mxu0
      %v919 = vadd.f32 %v849, %v918
      %v920 = vpop.f32.mrf.mxu0
      %v921 = vadd.f32 %v849, %v920
      %922 = vmatmul.bf16.gmra.mxu0 %v826
      %v923 = vpop.f32.mrf.mxu0
      %v924 = vadd.f32 %v849, %v923
      %v925 = vpop.f32.mrf.mxu0
      %v926 = vadd.f32 %v849, %v925
      %927 = vmatmul.bf16.gmra.mxu0 %v827
      %v928 = vpop.f32.mrf.mxu0
      %v929 = vadd.f32 %v849, %v928
      %v930 = vpop.f32.mrf.mxu0
      %v931 = vadd.f32 %v849, %v930
      %932 = vmatmul.bf16.gmra.mxu0 %v828
      %v933 = vpop.f32.mrf.mxu0
      %v934 = vadd.f32 %v849, %v933
      %v935 = vpop.f32.mrf.mxu0
      %v936 = vadd.f32 %v849, %v935
      %937 = vmatmul.bf16.gmra.mxu0 %v829
      %v938 = vpop.f32.mrf.mxu0
      %v939 = vadd.f32 %v849, %v938
      %v940 = vpop.f32.mrf.mxu0
      %v941 = vadd.f32 %v849, %v940
      %942 = vmatmul.bf16.gmra.mxu0 %v830
      %v943 = vpop.f32.mrf.mxu0
      %v944 = vadd.f32 %v849, %v943
      %v945 = vpop.f32.mrf.mxu0
      %v946 = vadd.f32 %v849, %v945
      %947 = vdwg.mxu0
      %v948 = vmax.f32 %v909, 0.0
      %v949 = vmax.f32 %v911, 0.0
      %v950 = vmax.f32 %v914, 0.0
      %v951 = vmax.f32 %v916, 0.0
      %v952 = vmax.f32 %v919, 0.0
      %v953 = vmax.f32 %v921, 0.0
      %v954 = vmax.f32 %v924, 0.0
      %v955 = vmax.f32 %v926, 0.0
      %v956 = vmax.f32 %v929, 0.0
      %v957 = vmax.f32 %v931, 0.0
      %v958 = vmax.f32 %v934, 0.0
      %v959 = vmax.f32 %v936, 0.0
      %v960 = vmax.f32 %v939, 0.0
      %v961 = vmax.f32 %v941, 0.0
      %v962 = vmax.f32 %v944, 0.0
      %v963 = vmax.f32 %v946, 0.0
      %v964 = vpack.c.bf16 %v949, %v948
      %v965 = vpack.c.bf16 %v951, %v950
      %v966 = vpack.c.bf16 %v953, %v952
      %v967 = vpack.c.bf16 %v955, %v954
      %v968 = vpack.c.bf16 %v957, %v956
      %v969 = vpack.c.bf16 %v959, %v958
      %v970 = vpack.c.bf16 %v961, %v960
      %v971 = vpack.c.bf16 %v963, %v962
      %v972 = vld [vmem:[%s9] sm:$0xf]
      %v973 = vld [vmem:[%s9 + $0x4] sm:$0xf]
      %v974 = vld [vmem:[%s9 + $0x8] sm:$0xf]
      %v975 = vld [vmem:[%s9 + $0xc] sm:$0xf]
      %v976 = vld [vmem:[%s9 + $0x10] sm:$0xf]
      %v977 = vld [vmem:[%s9 + $0x14] sm:$0xf]
      %v978 = vld [vmem:[%s9 + $0x18] sm:$0xf]
      %v979 = vld [vmem:[%s9 + $0x1c] sm:$0xf]
      %v980 = vld [vmem:[%s9 + $0x20] sm:$0xf]
      %v981 = vld [vmem:[%s9 + $0x24] sm:$0xf]
      %v982 = vld [vmem:[%s9 + $0x28] sm:$0xf]
      %v983 = vld [vmem:[%s9 + $0x2c] sm:$0xf]
      %v984 = vld [vmem:[%s9 + $0x30] sm:$0xf]
      %v985 = vld [vmem:[%s9 + $0x34] sm:$0xf]
      %v986 = vld [vmem:[%s9 + $0x38] sm:$0xf]
      %v987 = vld [vmem:[%s9 + $0x3c] sm:$0xf]
      %v988 = vld [vmem:[%s10] sm:$0x1]
      %v990 = vperm.slane %v988, 0
      %v1008 = vunpack.c.l.b16 %v972
      %v1009 = vunpack.c.l.b16 %v973
      %v1010 = vunpack.c.l.b16 %v974
      %v1011 = vunpack.c.l.b16 %v975
      %v1012 = vunpack.c.l.b16 %v976
      %v1013 = vunpack.c.l.b16 %v977
      %v1014 = vunpack.c.l.b16 %v978
      %v1015 = vunpack.c.l.b16 %v979
      %v1016 = vunpack.c.l.b16 %v980
      %v1017 = vunpack.c.l.b16 %v981
      %v1018 = vunpack.c.l.b16 %v982
      %v1019 = vunpack.c.l.b16 %v983
      %v1020 = vunpack.c.l.b16 %v984
      %v1021 = vunpack.c.l.b16 %v985
      %v1022 = vunpack.c.l.b16 %v986
      %v1023 = vunpack.c.l.b16 %v987
      %v1024 = vpack.c.b16 %v1009, %v1008
      %v1025 = vpack.c.b16 %v1011, %v1010
      %v1026 = vpack.c.b16 %v1013, %v1012
      %v1027 = vpack.c.b16 %v1015, %v1014
      %v1028 = vpack.c.b16 %v1017, %v1016
      %v1029 = vpack.c.b16 %v1019, %v1018
      %v1030 = vpack.c.b16 %v1021, %v1020
      %v1031 = vpack.c.b16 %v1023, %v1022
      %1040 = vmatpush.bf16.msra.mxu0 %v1031
      %1041 = vmatpush.bf16.msra.mxu0 %v1030
      %1042 = vmatpush.bf16.msra.mxu0 %v1029
      %1043 = vmatpush.bf16.msra.mxu0 %v1028
      %1044 = vmatpush.bf16.msra.mxu0 %v1027
      %1045 = vmatpush.bf16.msra.mxu0 %v1026
      %1046 = vmatpush.bf16.msra.mxu0 %v1025
      %1047 = vmatpush.bf16.msra.mxu0 %v1024
      %1048 = vmatmul.bf16.gmra.mxu0 %v964
      %v1049 = vpop.f32.mrf.mxu0
      %v1050 = vadd.f32 %v990, %v1049
      %v1051 = vpop.f32.mrf.mxu0
      %v1052 = vadd.f32 %v990, %v1051
      %1053 = vmatmul.bf16.gmra.mxu0 %v965
      %v1054 = vpop.f32.mrf.mxu0
      %v1055 = vadd.f32 %v990, %v1054
      %v1056 = vpop.f32.mrf.mxu0
      %v1057 = vadd.f32 %v990, %v1056
      %1058 = vmatmul.bf16.gmra.mxu0 %v966
      %v1059 = vpop.f32.mrf.mxu0
      %v1060 = vadd.f32 %v990, %v1059
      %v1061 = vpop.f32.mrf.mxu0
      %v1062 = vadd.f32 %v990, %v1061
      %1063 = vmatmul.bf16.gmra.mxu0 %v967
      %v1064 = vpop.f32.mrf.mxu0
      %v1065 = vadd.f32 %v990, %v1064
      %v1066 = vpop.f32.mrf.mxu0
      %v1067 = vadd.f32 %v990, %v1066
      %1068 = vmatmul.bf16.gmra.mxu0 %v968
      %v1069 = vpop.f32.mrf.mxu0
      %v1070 = vadd.f32 %v990, %v1069
      %v1071 = vpop.f32.mrf.mxu0
      %v1072 = vadd.f32 %v990, %v1071
      %1073 = vmatmul.bf16.gmra.mxu0 %v969
      %v1074 = vpop.f32.mrf.mxu0
      %v1075 = vadd.f32 %v990, %v1074
      %v1076 = vpop.f32.mrf.mxu0
      %v1077 = vadd.f32 %v990, %v1076
      %1078 = vmatmul.bf16.gmra.mxu0 %v970
      %v1079 = vpop.f32.mrf.mxu0
      %v1080 = vadd.f32 %v990, %v1079
      %v1081 = vpop.f32.mrf.mxu0
      %v1082 = vadd.f32 %v990, %v1081
      %1083 = vmatmul.bf16.gmra.mxu0 %v971
      %v1084 = vpop.f32.mrf.mxu0
      %v1085 = vadd.f32 %v990, %v1084
      %v1086 = vpop.f32.mrf.mxu0
      %v1087 = vadd.f32 %v990, %v1086
      %1088 = vdwg.mxu0
      %v1089 = vpack.c.bf16 %v1050, %v1050
      %v1090 = vpack.c.bf16 %v1052, %v1052
      %v1091 = vpack.c.bf16 %v1055, %v1055
      %v1092 = vpack.c.bf16 %v1057, %v1057
      %v1093 = vpack.c.bf16 %v1060, %v1060
      %v1094 = vpack.c.bf16 %v1062, %v1062
      %v1095 = vpack.c.bf16 %v1065, %v1065
      %v1096 = vpack.c.bf16 %v1067, %v1067
      %v1097 = vpack.c.bf16 %v1070, %v1070
      %v1098 = vpack.c.bf16 %v1072, %v1072
      %v1099 = vpack.c.bf16 %v1075, %v1075
      %v1100 = vpack.c.bf16 %v1077, %v1077
      %v1101 = vpack.c.bf16 %v1080, %v1080
      %v1102 = vpack.c.bf16 %v1082, %v1082
      %v1103 = vpack.c.bf16 %v1085, %v1085
      %v1104 = vpack.c.bf16 %v1087, %v1087
      %1105 = vst [vmem:[%s388] sm:$0xf] %v1089
      %1106 = vst [vmem:[%s388 + $0x4] sm:$0xf] %v1090
      %1107 = vst [vmem:[%s388 + $0x8] sm:$0xf] %v1091
      %1108 = vst [vmem:[%s388 + $0xc] sm:$0xf] %v1092
      %1109 = vst [vmem:[%s388 + $0x10] sm:$0xf] %v1093
      %1110 = vst [vmem:[%s388 + $0x14] sm:$0xf] %v1094
      %1111 = vst [vmem:[%s388 + $0x18] sm:$0xf] %v1095
      %1112 = vst [vmem:[%s388 + $0x1c] sm:$0xf] %v1096
      %1113 = vst [vmem:[%s388 + $0x20] sm:$0xf] %v1097
      %1114 = vst [vmem:[%s388 + $0x24] sm:$0xf] %v1098
      %1115 = vst [vmem:[%s388 + $0x28] sm:$0xf] %v1099
      %1116 = vst [vmem:[%s388 + $0x2c] sm:$0xf] %v1100
      %1117 = vst [vmem:[%s388 + $0x30] sm:$0xf] %v1101
      %1118 = vst [vmem:[%s388 + $0x34] sm:$0xf] %v1102
      %1119 = vst [vmem:[%s388 + $0x38] sm:$0xf] %v1103
      %1120 = vst [vmem:[%s388 + $0x3c] sm:$0xf] %v1104
      %s1121 = smul.u32 16, %s22
      %p1122 = scmp.lt.s32.totalorder %s1121, 31
      %s1123 = scalar_select %p1122, %s1121, 31
      %s1124 = smul.addr %s1123, 4
      %s1125 = scalar_lea.vmem %s11, %s1124
      // Predicated region
      $region65: #{encoder_forward.1} parent=63 // pred_check
        %p1126 = pneg %p276
      $region66: #{encoder_forward.1} parent=63 // pred_check_branch
        %1128 = sbr.rel (%p1126) target = $region68
      $region67: #{encoder_forward.1} parent=63 // pred_region
        %s1129 = smul.u32 16, %s22
      $region68: #{encoder_forward.1} parent=63 // pred_fallthru
        _
    $region64: #{encoder_forward.1} parent=5 // pred_fallthru
      _
    %p1130 = scmp.le.s32.totalorder 2, %s17
    // Predicated region
    $region69: #{encoder_forward.1} parent=5 // pred_check
      %p1131 = pneg %p1130
    $region70: #{encoder_forward.1} parent=5 // pred_check_branch
      %1133 = sbr.rel (%p1131) target = $region72
    $region71: #{encoder_forward.1} parent=5 // pred_region
      %s1134 = ssub.s32 %s17, 2
      // Predicated region
      $region73: #{encoder_forward.1} parent=71 // pred_check
        %p1135 = pneg %p282
      $region74: #{encoder_forward.1} parent=71 // pred_check_branch
        %1137 = sbr.rel (%p1135) target = $region76
      $region75: #{encoder_forward.1} parent=71 // pred_region
        %s1138 = smul.u32 16, %s23
        %p1139 = scmp.lt.s32.totalorder %s1138, 31
        %s1140 = scalar_select %p1139, %s1138, 31
        %s1141 = smul.addr %s1140, 4
        %s1142 = scalar_lea.vmem %s11, %s1141
      $region76: #{encoder_forward.1} parent=71 // pred_fallthru
        _
    $region72: #{encoder_forward.1} parent=5 // pred_fallthru
      _
  $region6: #{encoder_forward.1} parent=0 // loop_footer
    %s21 = sadd.s32 1, %s17
  $region7: #{encoder_forward.1} parent=0 // loop_footer_branch
    %16 = sbr.rel target = $region3
  $region8: #{encoder_forward.1} parent=0 // loop_exit
    _

</llo_original>
